<compile_context>
chip_gen: v6e
topology: v6e:2x2x1
jax: 0.10.0
libtpu: 0.0.40
codegen_flags: <defaults>
</compile_context>

<pallas_src>
import jax
import jax.numpy as jnp
import numpy as np
from jax.experimental import pallas as pl
from jax.experimental.pallas import tpu as pltpu

EPS = 1e-7
LAMDA_COORD = 5.0
LAMDA_NOOBJ = 0.5


def _bce_logits(x, t):
    # BCE(sigmoid(x), t) = softplus(-x) + (1 - t) * x   (numerically stable)
    return jnp.maximum(-x, 0.0) + jnp.log1p(jnp.exp(-jnp.abs(x))) + (1.0 - t) * x


def _yolo_branch_kernel(pred_ref, gt_ref, ranchor_ref, out_ref):
    """One grid step = one (batch, anchor) cell of one branch.

    pred_ref, gt_ref : (C, HW) f32  -- natural head layout (channels x spatial)
    ranchor_ref      : (2, 1)  f32  -- (1/anchor_w, 1/anchor_h) for this anchor
    out_ref          : (8, 128) f32 -- partial sums; sublane row k = term k
                        broadcast over lanes:
                        0 obj_bce, 1 noobj_bce, 2 xy_mse, 3 wh_mse, 4 cls_bce
    """
    p = pred_ref[...]
    g = gt_ref[...]

    obj = g[0:1]                                   # (1, HW) confidence target
    bce_conf = _bce_logits(p[0:1], obj)
    obj_sum = jnp.sum(obj * bce_conf)
    noobj_sum = jnp.sum((1.0 - obj) * bce_conf)

    # xy: MSE(pred, logit(clip(gt, eps, 1-eps)))
    g_xy = jnp.clip(g[1:3], EPS, 1.0 - EPS)
    g_xy = jnp.log(g_xy) - jnp.log1p(-g_xy)        # logit without a divide
    xy_sum = jnp.sum(obj * (p[1:3] - g_xy) ** 2)

    # wh: MSE(pred, gt * (1/anchor) + eps)
    g_wh = g[3:5] * ranchor_ref[...] + EPS         # (2,HW) * (2,1)
    wh_sum = jnp.sum(obj * (p[3:5] - g_wh) ** 2)

    # classes
    bce_cls = _bce_logits(p[5:], g[5:])
    cls_sum = jnp.sum(obj * bce_cls)

    out_ref[...] = jnp.zeros_like(out_ref)
    out_ref[0:1, :] = jnp.full((1, 128), obj_sum, jnp.float32)
    out_ref[1:2, :] = jnp.full((1, 128), noobj_sum, jnp.float32)
    out_ref[2:3, :] = jnp.full((1, 128), xy_sum, jnp.float32)
    out_ref[3:4, :] = jnp.full((1, 128), wh_sum, jnp.float32)
    out_ref[4:5, :] = jnp.full((1, 128), cls_sum, jnp.float32)


def yolo_loss_pallas(preds, gts, anchors, branch_num, anchor_num, batch_size):
    """preds/gts: lists of (B, A, 5+classes, H, W) f32 arrays (one per branch)."""
    obj_s = jnp.float32(0.0)
    noobj_s = jnp.float32(0.0)
    xy_s = jnp.float32(0.0)
    wh_s = jnp.float32(0.0)
    cls_s = jnp.float32(0.0)

    for bi in range(branch_num):
        B, A, Cb, H, W = preds[bi].shape
        HW = H * W
        # Free reshapes of the contiguous head layout — no transpose / copy.
        pred2 = preds[bi].reshape(B, A, Cb, HW)
        gt2 = gts[bi].reshape(B, A, Cb, HW)

        # Tiny reciprocal-anchor table for this branch: (A, 2, 1) f32.
        ra = np.empty((A, 2, 1), np.float32)
        for ai in range(A):
            a_w, a_h = anchors[anchor_num * (branch_num - bi - 1) + ai]
            ra[ai, 0, 0] = 1.0 / a_w
            ra[ai, 1, 0] = 1.0 / a_h
        ra = jnp.asarray(ra)

        # VMEM budget: 2 inputs x 2 pipeline buffers + ~6-8 tile-sized compiler
        # temporaries.  >=32 MiB protects v5e's 16 MiB default scoped limit;
        # <=64 MiB keeps v7x (64 MiB physical) safe.
        block_bytes = Cb * HW * 4
        vmem_limit = int(min(64 * 1024 * 1024,
                             max(32 * 1024 * 1024, 12 * block_bytes)))

        partials = pl.pallas_call(
            _yolo_branch_kernel,
            out_shape=jax.ShapeDtypeStruct((B, A, 8, 128), jnp.float32),
            grid=(B, A),
            in_specs=[
                pl.BlockSpec((None, None, Cb, HW), lambda b, a: (b, a, 0, 0)),
                pl.BlockSpec((None, None, Cb, HW), lambda b, a: (b, a, 0, 0)),
                pl.BlockSpec((None, 2, 1), lambda b, a: (a, 0, 0)),
            ],
            out_specs=pl.BlockSpec((None, None, 8, 128),
                                   lambda b, a: (b, a, 0, 0)),
            compiler_params=pltpu.CompilerParams(
                dimension_semantics=("parallel", "parallel"),
                vmem_limit_bytes=vmem_limit),
        )(pred2, gt2, ra)

        obj_s = obj_s + jnp.sum(partials[:, :, 0, 0])
        noobj_s = noobj_s + jnp.sum(partials[:, :, 1, 0])
        xy_s = xy_s + jnp.sum(partials[:, :, 2, 0])
        wh_s = wh_s + jnp.sum(partials[:, :, 3, 0])
        cls_s = cls_s + jnp.sum(partials[:, :, 4, 0])

    bs = jnp.float32(batch_size)
    confidence_loss = LAMDA_COORD * (obj_s / bs) + LAMDA_NOOBJ * (noobj_s / bs)
    location_loss = xy_s / bs + wh_s / bs
    class_loss = cls_s / bs
    total_loss = confidence_loss + location_loss + class_loss
    return total_loss, confidence_loss, location_loss, class_loss


def yolo_loss_ref(preds, gts, anchors, branch_num, anchor_num, batch_size):
    """Pure-JAX reference mirroring the PyTorch forward (BCELoss log-clamp form)."""
    def bce(pp, tt):
        return -(tt * jnp.maximum(jnp.log(pp), -100.0)
                 + (1.0 - tt) * jnp.maximum(jnp.log(1.0 - pp), -100.0))

    conf = 0.0
    loc = 0.0
    cls = 0.0
    for bi in range(branch_num):
        p = preds[bi]
        g = gts[bi]
        obj = g[:, :, 0:1]
        noobj = 1.0 - obj
        p_conf = jax.nn.sigmoid(p[:, :, 0:1])
        p_cls = jax.nn.sigmoid(p[:, :, 5:])
        g_xy = jnp.clip(g[:, :, 1:3], EPS, 1.0 - EPS)
        g_xy = jnp.log(g_xy / (1.0 - g_xy))
        g_wh_parts = []
        for ai in range(anchor_num):
            aw, ah = anchors[anchor_num * (branch_num - bi - 1) + ai]
            gw = g[:, ai:ai + 1, 3:4] / aw + EPS
            gh = g[:, ai:ai + 1, 4:5] / ah + EPS
            g_wh_parts.append(jnp.concatenate([gw, gh], axis=2))
        g_wh = jnp.concatenate(g_wh_parts, axis=1)
        obj_loss = jnp.sum(obj * bce(p_conf, g[:, :, 0:1])) / batch_size
        noobj_loss = jnp.sum(noobj * bce(p_conf, g[:, :, 0:1])) / batch_size
        conf = conf + LAMDA_COORD * obj_loss + LAMDA_NOOBJ * noobj_loss
        xy_loss = jnp.sum(obj * (p[:, :, 1:3] - g_xy) ** 2) / batch_size
        wh_loss = jnp.sum(obj * (p[:, :, 3:5] - g_wh) ** 2) / batch_size
        loc = loc + xy_loss + wh_loss
        cls = cls + jnp.sum(obj * bce(p_cls, g[:, :, 5:])) / batch_size
    total = conf + loc + cls
    return total, conf, loc, cls


if __name__ == "__main__":
    # Small, deterministic configuration.
    batch = 2
    classes = 4
    branch_num = 3
    anchor_num = 3
    spatials = [16, 8, 4]
    C = 5 + classes
    anchors = [(10.0, 13.0), (16.0, 30.0), (33.0, 23.0),
               (30.0, 61.0), (62.0, 45.0), (59.0, 119.0),
               (116.0, 90.0), (156.0, 198.0), (373.0, 326.0)]

    key = jax.random.PRNGKey(0)
    preds, gts = [], []
    for s in spatials:
        key, kp, kc, kxy, kwh, kcl = jax.random.split(key, 6)
        pred = jax.random.normal(kp, (batch, anchor_num, C, s, s), jnp.float32)
        conf = (jax.random.uniform(kc, (batch, anchor_num, 1, s, s)) > 0.7
                ).astype(jnp.float32)
        xy = jax.random.uniform(kxy, (batch, anchor_num, 2, s, s),
                                minval=0.05, maxval=0.95)
        wh = jax.random.uniform(kwh, (batch, anchor_num, 2, s, s),
                                minval=0.1, maxval=2.0)
        cl = jax.random.uniform(kcl, (batch, anchor_num, classes, s, s))
        gt = jnp.concatenate([conf, xy, wh, cl], axis=2).astype(jnp.float32)
        preds.append(pred)
        gts.append(gt)

    out = yolo_loss_pallas(preds, gts, anchors, branch_num, anchor_num, batch)
    out = jax.block_until_ready(out)
    ref = yolo_loss_ref(preds, gts, anchors, branch_num, anchor_num, batch)

    np.testing.assert_allclose(np.array(out), np.array(ref), rtol=2e-3, atol=1e-3)
    print("KERNEL_OK")
</pallas_src>

<mosaic_0001>
module attributes {stable_mosaic.version = 11 : i64} {
  func.func @_yolo_branch_kernel(%arg0: i32, %arg1: i32, %arg2: memref<1x1x9x256xf32, #tpu.memory_space<vmem>>, %arg3: memref<1x1x9x256xf32, #tpu.memory_space<vmem>>, %arg4: memref<1x2x1xf32, #tpu.memory_space<vmem>>, %arg5: memref<1x1x8x128xf32, #tpu.memory_space<vmem>>) attributes {dimension_semantics = [#tpu.dimension_semantics<parallel>, #tpu.dimension_semantics<parallel>], iteration_bounds = array<i64: 2, 3>, scalar_prefetch = 0 : i64, scratch_operands = 0 : i64, tpu.core_type = #tpu.core_type<tc>, window_params = [{transform_indices = @transform_0, window_bounds = array<i64: 1, 1, 9, 256>}, {transform_indices = @transform_1, window_bounds = array<i64: 1, 1, 9, 256>}, {transform_indices = @transform_2, window_bounds = array<i64: 1, 2, 1>}, {transform_indices = @transform_3, window_bounds = array<i64: 1, 1, 8, 128>}]} {
    %c0 = arith.constant 0 : index
    %c0_0 = arith.constant 0 : index
    %c0_1 = arith.constant 0 : index
    %c0_2 = arith.constant 0 : index
    %0 = vector.load %arg2[%c0, %c0_0, %c0_1, %c0_2] : memref<1x1x9x256xf32, #tpu.memory_space<vmem>>, vector<1x1x9x256xf32>
    %1 = vector.shape_cast %0 : vector<1x1x9x256xf32> to vector<9x256xf32>
    %c0_3 = arith.constant 0 : index
    %c0_4 = arith.constant 0 : index
    %c0_5 = arith.constant 0 : index
    %c0_6 = arith.constant 0 : index
    %2 = vector.load %arg3[%c0_3, %c0_4, %c0_5, %c0_6] : memref<1x1x9x256xf32, #tpu.memory_space<vmem>>, vector<1x1x9x256xf32>
    %3 = vector.shape_cast %2 : vector<1x1x9x256xf32> to vector<9x256xf32>
    %4 = vector.extract_strided_slice %3 {offsets = [0, 0], sizes = [1, 256], strides = [1, 1]} : vector<9x256xf32> to vector<1x256xf32>
    %5 = vector.extract_strided_slice %1 {offsets = [0, 0], sizes = [1, 256], strides = [1, 1]} : vector<9x256xf32> to vector<1x256xf32>
    %cst = arith.constant 0.000000e+00 : f32
    %6 = vector.broadcast %cst : f32 to vector<1x256xf32>
    %7 = arith.subf %6, %5 : vector<1x256xf32>
    %cst_7 = arith.constant 0.000000e+00 : f32
    %8 = vector.broadcast %cst_7 : f32 to vector<1x256xf32>
    %9 = arith.maximumf %7, %8 : vector<1x256xf32>
    %10 = math.absf %5 : vector<1x256xf32>
    %cst_8 = arith.constant 0.000000e+00 : f32
    %11 = vector.broadcast %cst_8 : f32 to vector<1x256xf32>
    %12 = arith.subf %11, %10 : vector<1x256xf32>
    %13 = math.exp %12 : vector<1x256xf32>
    %14 = math.log1p %13 : vector<1x256xf32>
    %15 = arith.addf %9, %14 : vector<1x256xf32>
    %cst_9 = arith.constant 1.000000e+00 : f32
    %16 = vector.broadcast %cst_9 : f32 to vector<1x256xf32>
    %17 = arith.subf %16, %4 : vector<1x256xf32>
    %18 = arith.mulf %17, %5 : vector<1x256xf32>
    %19 = arith.addf %15, %18 : vector<1x256xf32>
    %20 = arith.mulf %4, %19 : vector<1x256xf32>
    %21 = vector.shape_cast %20 : vector<1x256xf32> to vector<1x1x256xf32>
    %cst_10 = arith.constant dense<0.000000e+00> : vector<1xf32>
    %22 = vector.multi_reduction <add>, %21, %cst_10 [1, 2] : vector<1x1x256xf32> to vector<1xf32>
    %23 = vector.shape_cast %22 : vector<1xf32> to vector<1x1x1xf32>
    %24 = vector.extract %23[0, 0, 0] : f32 from vector<1x1x1xf32>
    %cst_11 = arith.constant 1.000000e+00 : f32
    %25 = vector.broadcast %cst_11 : f32 to vector<1x256xf32>
    %26 = arith.subf %25, %4 : vector<1x256xf32>
    %27 = arith.mulf %26, %19 : vector<1x256xf32>
    %28 = vector.shape_cast %27 : vector<1x256xf32> to vector<1x1x256xf32>
    %cst_12 = arith.constant dense<0.000000e+00> : vector<1xf32>
    %29 = vector.multi_reduction <add>, %28, %cst_12 [1, 2] : vector<1x1x256xf32> to vector<1xf32>
    %30 = vector.shape_cast %29 : vector<1xf32> to vector<1x1x1xf32>
    %31 = vector.extract %30[0, 0, 0] : f32 from vector<1x1x1xf32>
    %32 = vector.extract_strided_slice %3 {offsets = [1, 0], sizes = [2, 256], strides = [1, 1]} : vector<9x256xf32> to vector<2x256xf32>
    %cst_13 = arith.constant 1.000000e-07 : f32
    %cst_14 = arith.constant 0.99999988 : f32
    %33 = vector.broadcast %cst_13 : f32 to vector<2x256xf32>
    %34 = arith.maximumf %33, %32 : vector<2x256xf32>
    %35 = vector.broadcast %cst_14 : f32 to vector<2x256xf32>
    %36 = arith.minimumf %35, %34 : vector<2x256xf32>
    %37 = math.log %36 : vector<2x256xf32>
    %cst_15 = arith.constant 0.000000e+00 : f32
    %38 = vector.broadcast %cst_15 : f32 to vector<2x256xf32>
    %39 = arith.subf %38, %36 : vector<2x256xf32>
    %40 = math.log1p %39 : vector<2x256xf32>
    %41 = arith.subf %37, %40 : vector<2x256xf32>
    %42 = vector.extract_strided_slice %1 {offsets = [1, 0], sizes = [2, 256], strides = [1, 1]} : vector<9x256xf32> to vector<2x256xf32>
    %43 = arith.subf %42, %41 : vector<2x256xf32>
    %44 = arith.mulf %43, %43 : vector<2x256xf32>
    %45 = vector.broadcast %4 : vector<1x256xf32> to vector<2x256xf32>
    %46 = arith.mulf %45, %44 : vector<2x256xf32>
    %47 = vector.shape_cast %46 : vector<2x256xf32> to vector<1x2x256xf32>
    %cst_16 = arith.constant dense<0.000000e+00> : vector<1xf32>
    %48 = vector.multi_reduction <add>, %47, %cst_16 [1, 2] : vector<1x2x256xf32> to vector<1xf32>
    %49 = vector.shape_cast %48 : vector<1xf32> to vector<1x1x1xf32>
    %50 = vector.extract %49[0, 0, 0] : f32 from vector<1x1x1xf32>
    %51 = vector.extract_strided_slice %3 {offsets = [3, 0], sizes = [2, 256], strides = [1, 1]} : vector<9x256xf32> to vector<2x256xf32>
    %c0_17 = arith.constant 0 : index
    %c0_18 = arith.constant 0 : index
    %c0_19 = arith.constant 0 : index
    %52 = vector.load %arg4[%c0_17, %c0_18, %c0_19] : memref<1x2x1xf32, #tpu.memory_space<vmem>>, vector<1x2x1xf32>
    %53 = vector.shape_cast %52 : vector<1x2x1xf32> to vector<2x1xf32>
    %54 = vector.broadcast %53 : vector<2x1xf32> to vector<2x256xf32>
    %55 = arith.mulf %51, %54 : vector<2x256xf32>
    %cst_20 = arith.constant 1.000000e-07 : f32
    %56 = vector.broadcast %cst_20 : f32 to vector<2x256xf32>
    %57 = arith.addf %55, %56 : vector<2x256xf32>
    %58 = vector.extract_strided_slice %1 {offsets = [3, 0], sizes = [2, 256], strides = [1, 1]} : vector<9x256xf32> to vector<2x256xf32>
    %59 = arith.subf %58, %57 : vector<2x256xf32>
    %60 = arith.mulf %59, %59 : vector<2x256xf32>
    %61 = vector.broadcast %4 : vector<1x256xf32> to vector<2x256xf32>
    %62 = arith.mulf %61, %60 : vector<2x256xf32>
    %63 = vector.shape_cast %62 : vector<2x256xf32> to vector<1x2x256xf32>
    %cst_21 = arith.constant dense<0.000000e+00> : vector<1xf32>
    %64 = vector.multi_reduction <add>, %63, %cst_21 [1, 2] : vector<1x2x256xf32> to vector<1xf32>
    %65 = vector.shape_cast %64 : vector<1xf32> to vector<1x1x1xf32>
    %66 = vector.extract %65[0, 0, 0] : f32 from vector<1x1x1xf32>
    %67 = vector.extract_strided_slice %1 {offsets = [5, 0], sizes = [4, 256], strides = [1, 1]} : vector<9x256xf32> to vector<4x256xf32>
    %68 = vector.extract_strided_slice %3 {offsets = [5, 0], sizes = [4, 256], strides = [1, 1]} : vector<9x256xf32> to vector<4x256xf32>
    %cst_22 = arith.constant 0.000000e+00 : f32
    %69 = vector.broadcast %cst_22 : f32 to vector<4x256xf32>
    %70 = arith.subf %69, %67 : vector<4x256xf32>
    %cst_23 = arith.constant 0.000000e+00 : f32
    %71 = vector.broadcast %cst_23 : f32 to vector<4x256xf32>
    %72 = arith.maximumf %70, %71 : vector<4x256xf32>
    %73 = math.absf %67 : vector<4x256xf32>
    %cst_24 = arith.constant 0.000000e+00 : f32
    %74 = vector.broadcast %cst_24 : f32 to vector<4x256xf32>
    %75 = arith.subf %74, %73 : vector<4x256xf32>
    %76 = math.exp %75 : vector<4x256xf32>
    %77 = math.log1p %76 : vector<4x256xf32>
    %78 = arith.addf %72, %77 : vector<4x256xf32>
    %cst_25 = arith.constant 1.000000e+00 : f32
    %79 = vector.broadcast %cst_25 : f32 to vector<4x256xf32>
    %80 = arith.subf %79, %68 : vector<4x256xf32>
    %81 = arith.mulf %80, %67 : vector<4x256xf32>
    %82 = arith.addf %78, %81 : vector<4x256xf32>
    %83 = vector.broadcast %4 : vector<1x256xf32> to vector<4x256xf32>
    %84 = arith.mulf %83, %82 : vector<4x256xf32>
    %85 = vector.shape_cast %84 : vector<4x256xf32> to vector<1x4x256xf32>
    %cst_26 = arith.constant dense<0.000000e+00> : vector<1xf32>
    %86 = vector.multi_reduction <add>, %85, %cst_26 [1, 2] : vector<1x4x256xf32> to vector<1xf32>
    %87 = vector.shape_cast %86 : vector<1xf32> to vector<1x1x1xf32>
    %88 = vector.extract %87[0, 0, 0] : f32 from vector<1x1x1xf32>
    %cst_27 = arith.constant 0.000000e+00 : f32
    %89 = vector.broadcast %cst_27 : f32 to vector<8x128xf32>
    %c0_28 = arith.constant 0 : index
    %c0_29 = arith.constant 0 : index
    %c0_30 = arith.constant 0 : index
    %c0_31 = arith.constant 0 : index
    %90 = vector.load %arg5[%c0_28, %c0_29, %c0_30, %c0_31] : memref<1x1x8x128xf32, #tpu.memory_space<vmem>>, vector<1x1x8x128xf32>
    %91 = vector.shape_cast %90 : vector<1x1x8x128xf32> to vector<8x128xf32>
    %92 = vector.shape_cast %89 : vector<8x128xf32> to vector<1x1x8x128xf32>
    tpu.vector_store %arg5[%c0_28, %c0_29, %c0_30, %c0_31], %92 {strides = array<i32>} : memref<1x1x8x128xf32, #tpu.memory_space<vmem>>, vector<1x1x8x128xf32>,
    %93 = vector.broadcast %24 : f32 to vector<1x128xf32>
    %c0_32 = arith.constant 0 : index
    %c0_33 = arith.constant 0 : index
    %c0_34 = arith.constant 0 : index
    %c0_35 = arith.constant 0 : index
    %94 = vector.load %arg5[%c0_32, %c0_33, %c0_34, %c0_35] : memref<1x1x8x128xf32, #tpu.memory_space<vmem>>, vector<1x1x1x128xf32>
    %95 = vector.shape_cast %94 : vector<1x1x1x128xf32> to vector<1x128xf32>
    %96 = vector.shape_cast %93 : vector<1x128xf32> to vector<1x1x1x128xf32>
    tpu.vector_store %arg5[%c0_32, %c0_33, %c0_34, %c0_35], %96 {strides = array<i32>} : memref<1x1x8x128xf32, #tpu.memory_space<vmem>>, vector<1x1x1x128xf32>,
    %97 = vector.broadcast %31 : f32 to vector<1x128xf32>
    %c0_36 = arith.constant 0 : index
    %c0_37 = arith.constant 0 : index
    %c1 = arith.constant 1 : index
    %c0_38 = arith.constant 0 : index
    %98 = vector.load %arg5[%c0_36, %c0_37, %c1, %c0_38] : memref<1x1x8x128xf32, #tpu.memory_space<vmem>>, vector<1x1x1x128xf32>
    %99 = vector.shape_cast %98 : vector<1x1x1x128xf32> to vector<1x128xf32>
    %100 = vector.shape_cast %97 : vector<1x128xf32> to vector<1x1x1x128xf32>
    tpu.vector_store %arg5[%c0_36, %c0_37, %c1, %c0_38], %100 {strides = array<i32>} : memref<1x1x8x128xf32, #tpu.memory_space<vmem>>, vector<1x1x1x128xf32>,
    %101 = vector.broadcast %50 : f32 to vector<1x128xf32>
    %c0_39 = arith.constant 0 : index
    %c0_40 = arith.constant 0 : index
    %c2 = arith.constant 2 : index
    %c0_41 = arith.constant 0 : index
    %102 = vector.load %arg5[%c0_39, %c0_40, %c2, %c0_41] : memref<1x1x8x128xf32, #tpu.memory_space<vmem>>, vector<1x1x1x128xf32>
    %103 = vector.shape_cast %102 : vector<1x1x1x128xf32> to vector<1x128xf32>
    %104 = vector.shape_cast %101 : vector<1x128xf32> to vector<1x1x1x128xf32>
    tpu.vector_store %arg5[%c0_39, %c0_40, %c2, %c0_41], %104 {strides = array<i32>} : memref<1x1x8x128xf32, #tpu.memory_space<vmem>>, vector<1x1x1x128xf32>,
    %105 = vector.broadcast %66 : f32 to vector<1x128xf32>
    %c0_42 = arith.constant 0 : index
    %c0_43 = arith.constant 0 : index
    %c3 = arith.constant 3 : index
    %c0_44 = arith.constant 0 : index
    %106 = vector.load %arg5[%c0_42, %c0_43, %c3, %c0_44] : memref<1x1x8x128xf32, #tpu.memory_space<vmem>>, vector<1x1x1x128xf32>
    %107 = vector.shape_cast %106 : vector<1x1x1x128xf32> to vector<1x128xf32>
    %108 = vector.shape_cast %105 : vector<1x128xf32> to vector<1x1x1x128xf32>
    tpu.vector_store %arg5[%c0_42, %c0_43, %c3, %c0_44], %108 {strides = array<i32>} : memref<1x1x8x128xf32, #tpu.memory_space<vmem>>, vector<1x1x1x128xf32>,
    %109 = vector.broadcast %88 : f32 to vector<1x128xf32>
    %c0_45 = arith.constant 0 : index
    %c0_46 = arith.constant 0 : index
    %c4 = arith.constant 4 : index
    %c0_47 = arith.constant 0 : index
    %110 = vector.load %arg5[%c0_45, %c0_46, %c4, %c0_47] : memref<1x1x8x128xf32, #tpu.memory_space<vmem>>, vector<1x1x1x128xf32>
    %111 = vector.shape_cast %110 : vector<1x1x1x128xf32> to vector<1x128xf32>
    %112 = vector.shape_cast %109 : vector<1x128xf32> to vector<1x1x1x128xf32>
    tpu.vector_store %arg5[%c0_45, %c0_46, %c4, %c0_47], %112 {strides = array<i32>} : memref<1x1x8x128xf32, #tpu.memory_space<vmem>>, vector<1x1x1x128xf32>,
    return
  }
  func.func @transform_0(%arg0: i32, %arg1: i32) -> (i32, i32, i32, i32) {
    %c0_i32 = arith.constant 0 : i32
    %c0_i32_0 = arith.constant 0 : i32
    %c0_i32_1 = arith.constant 0 : i32
    return %arg0, %arg1, %c0_i32, %c0_i32_0 : i32, i32, i32, i32
  }
  func.func @transform_1(%arg0: i32, %arg1: i32) -> (i32, i32, i32, i32) {
    %c0_i32 = arith.constant 0 : i32
    %c0_i32_0 = arith.constant 0 : i32
    %c0_i32_1 = arith.constant 0 : i32
    return %arg0, %arg1, %c0_i32, %c0_i32_0 : i32, i32, i32, i32
  }
  func.func @transform_2(%arg0: i32, %arg1: i32) -> (i32, i32, i32) {
    %c0_i32 = arith.constant 0 : i32
    %c0_i32_0 = arith.constant 0 : i32
    %c0_i32_1 = arith.constant 0 : i32
    return %arg1, %c0_i32, %c0_i32_0 : i32, i32, i32
  }
  func.func @transform_3(%arg0: i32, %arg1: i32) -> (i32, i32, i32, i32) {
    %c0_i32 = arith.constant 0 : i32
    %c0_i32_0 = arith.constant 0 : i32
    %c0_i32_1 = arith.constant 0 : i32
    return %arg0, %arg1, %c0_i32, %c0_i32_0 : i32, i32, i32, i32
  }
}

</mosaic_0001>

<llo_original>
// kernel: tpu_custom_call.1
$region0: #{tpu_custom_call.1}
  #allocation0 [shape = 'u32[]', space=smem, size = 0x4, offset = 0x4, fixed_abs, tag = 'smem constant byte address 0x4 - core index']
  #allocation1 [shape = 'u32[144,128]{1,0:T(1,128)}', space=vmem, size = 0x12000, scoped, tag = 'internal scratch']
  %s0 = inlined_call_operand.vmem [shape: f32[2,3,9,256], index: 0, kind: input, shape index: {}]
  %s1 = inlined_call_operand.vmem [shape: f32[2,3,9,256], index: 1, kind: input, shape index: {}]
  %s2 = inlined_call_operand.vmem [shape: f32[3,2,1], index: 2, kind: input, shape index: {}]
  %s3 = inlined_call_operand.hbm [shape: f32[2,3,8,128], index: 3, kind: output, shape index: {}]
  %s4 = sld [smem:[#allocation0]]
  $region45: #{tpu_custom_call.1} parent=0
    _
  %s6 = ssub.s32 1, %s4
  %s7 = scalar_select 0, %s6, %s4
  $region1: #{tpu_custom_call.1} parent=0
    #allocation2 [shape = 'u8[8192]{0}', space=vmem, size = 0x2000, scoped, tag = 'output window, operand 0']
    #allocation3 [shape = 's32[2]{0}', space=sflag, size = 0x8, scoped, tag = 'scoped memory for tpu_custom_call.1']
    %8 = vsyncpa [#allocation3], 0
    %s9 = scalar_lea.sflag [#allocation3], 1
    %10 = vsyncpa %s9, 0
    loop: start=0, step=1, limit=8
    $region2: #{tpu_custom_call.1} parent=1 // loop_pre_header
      _
    $region3: #{tpu_custom_call.1} parent=1 // loop_header
      %s12 = sphi 0, %s16
      %p13 = scmp.ge.s32.totalorder %s12, 8
      %s19 = sphi 0, %s31
      %s20 = sphi 0, %s27
      %s21 = sphi 0, %s19
      %s22 = sphi 0, %s20
      %s23 = sphi 0, %s21
      %s24 = sphi 0, %s22
      %s36 = sphi 0, %s38
      %s39 = sphi 0, %s36
      %s40 = sphi 0, %s39
      %s56 = sphi 0, %s40
      %s64 = sphi 0, %s66
      %s67 = sphi 0, %s64
      %s68 = sphi 0, %s67
      %s84 = sphi 0, %s68
      %s90 = sphi 0, %s92
      %s93 = sphi 0, %s90
      %s94 = sphi 0, %s93
      %s110 = sphi 0, %s94
      %s118 = sphi 0, %s120
      %s121 = sphi 0, %s118
      %s122 = sphi 0, %s121
      %s138 = sphi 0, %s122
    $region4: #{tpu_custom_call.1} parent=1 // loop_header_branch
      %15 = sbr.rel (%p13) target = $region8
    $region5: #{tpu_custom_call.1} parent=1 // loop_body
      %s17 = ssub.s32 %s12, 1
      %s18 = ssub.s32 %s12, 2
      %s25 = sadd.s32 1, %s20
      %p26 = scmp.ge.s32.totalorder %s25, 3
      %s27 = scalar_select %p26, 0, %s25
      %s28 = sadd.s32 1, %s19
      %s29 = scalar_select %p26, %s28, %s19
      %p30 = scmp.ge.s32.totalorder %s29, 2
      %s31 = scalar_select %p30, 0, %s29
      %s32 = ssub.s32 %s19, %s31
      %s33 = ssub.s32 %s20, %s27
      %s34 = sor.u32 %s32, %s33
      %p35 = scmp.eq.s32.totalorder %s34, 0
      %s37 = sadd.s32 %s36, 1
      %s38 = scalar_select %p35, %s36, %s37
      %p41 = pneg %p35
      %p42 = scmp.eq.s32.totalorder %s12, 5
      %p43 = por %p41, %p42
      %p44 = scmp.ne.s32.totalorder %s36, %s39
      %p45 = scmp.eq.s32.totalorder %s12, 0
      %p46 = por %p44, %p45
      %p47 = scmp.ne.s32.totalorder %s36, %s39
      %p48 = scmp.eq.s32.totalorder %s17, 5
      %p49 = por %p47, %p48
      %p50 = scmp.ne.s32.totalorder %s39, %s40
      %p51 = scmp.eq.s32.totalorder %s17, 0
      %p52 = por %p50, %p51
      %p53 = scmp.ne.s32.totalorder %s39, %s40
      %p54 = scmp.eq.s32.totalorder %s18, 5
      %p55 = por %p53, %p54
      %p57 = scmp.ne.s32.totalorder %s40, %s56
      %p58 = scmp.eq.s32.totalorder %s18, 0
      %p59 = por %p57, %p58
      %s60 = ssub.s32 %s19, %s31
      %s61 = ssub.s32 %s20, %s27
      %s62 = sor.u32 %s60, %s61
      %p63 = scmp.eq.s32.totalorder %s62, 0
      %s65 = sadd.s32 %s64, 1
      %s66 = scalar_select %p63, %s64, %s65
      %p69 = pneg %p63
      %p70 = scmp.eq.s32.totalorder %s12, 5
      %p71 = por %p69, %p70
      %p72 = scmp.ne.s32.totalorder %s64, %s67
      %p73 = scmp.eq.s32.totalorder %s12, 0
      %p74 = por %p72, %p73
      %p75 = scmp.ne.s32.totalorder %s64, %s67
      %p76 = scmp.eq.s32.totalorder %s17, 5
      %p77 = por %p75, %p76
      %p78 = scmp.ne.s32.totalorder %s67, %s68
      %p79 = scmp.eq.s32.totalorder %s17, 0
      %p80 = por %p78, %p79
      %p81 = scmp.ne.s32.totalorder %s67, %s68
      %p82 = scmp.eq.s32.totalorder %s18, 5
      %p83 = por %p81, %p82
      %p85 = scmp.ne.s32.totalorder %s68, %s84
      %p86 = scmp.eq.s32.totalorder %s18, 0
      %p87 = por %p85, %p86
      %s88 = ssub.s32 %s20, %s27
      %p89 = scmp.eq.s32.totalorder %s88, 0
      %s91 = sadd.s32 %s90, 1
      %s92 = scalar_select %p89, %s90, %s91
      %p95 = pneg %p89
      %p96 = scmp.eq.s32.totalorder %s12, 5
      %p97 = por %p95, %p96
      %p98 = scmp.ne.s32.totalorder %s90, %s93
      %p99 = scmp.eq.s32.totalorder %s12, 0
      %p100 = por %p98, %p99
      %p101 = scmp.ne.s32.totalorder %s90, %s93
      %p102 = scmp.eq.s32.totalorder %s17, 5
      %p103 = por %p101, %p102
      %p104 = scmp.ne.s32.totalorder %s93, %s94
      %p105 = scmp.eq.s32.totalorder %s17, 0
      %p106 = por %p104, %p105
      %p107 = scmp.ne.s32.totalorder %s93, %s94
      %p108 = scmp.eq.s32.totalorder %s18, 5
      %p109 = por %p107, %p108
      %p111 = scmp.ne.s32.totalorder %s94, %s110
      %p112 = scmp.eq.s32.totalorder %s18, 0
      %p113 = por %p111, %p112
      %s114 = ssub.s32 %s19, %s31
      %s115 = ssub.s32 %s20, %s27
      %s116 = sor.u32 %s114, %s115
      %p117 = scmp.eq.s32.totalorder %s116, 0
      %s119 = sadd.s32 %s118, 1
      %s120 = scalar_select %p117, %s118, %s119
      %p123 = pneg %p117
      %p124 = scmp.eq.s32.totalorder %s12, 5
      %p125 = por %p123, %p124
      %p126 = scmp.ne.s32.totalorder %s118, %s121
      %p127 = scmp.eq.s32.totalorder %s12, 0
      %p128 = por %p126, %p127
      %p129 = scmp.ne.s32.totalorder %s118, %s121
      %p130 = scmp.eq.s32.totalorder %s17, 5
      %p131 = por %p129, %p130
      %p132 = scmp.ne.s32.totalorder %s121, %s122
      %p133 = scmp.eq.s32.totalorder %s17, 0
      %p134 = por %p132, %p133
      %p135 = scmp.ne.s32.totalorder %s121, %s122
      %p136 = scmp.eq.s32.totalorder %s18, 5
      %p137 = por %p135, %p136
      %p139 = scmp.ne.s32.totalorder %s122, %s138
      %p140 = scmp.eq.s32.totalorder %s18, 0
      %p141 = por %p139, %p140
      %p142 = scmp.le.s32.totalorder 1, %s12
      %p143 = scmp.lt.s32.totalorder %s12, 7
      %p144 = pnand %p142, %p143
      %p145 = pneg %p144
      // Predicated region
      $region9: #{tpu_custom_call.1} parent=5 // pred_check
        _
      $region10: #{tpu_custom_call.1} parent=5 // pred_check_branch
        %147 = sbr.rel (%p144) target = $region12
      $region11: #{tpu_custom_call.1} parent=5 // pred_region
        %s148 = ssub.s32 %s12, 1
      $region12: #{tpu_custom_call.1} parent=5 // pred_fallthru
        _
      %p149 = scmp.lt.s32.totalorder %s12, 6
      // Predicated region
      $region13: #{tpu_custom_call.1} parent=5 // pred_check
        %p150 = pneg %p149
      $region14: #{tpu_custom_call.1} parent=5 // pred_check_branch
        %152 = sbr.rel (%p150) target = $region16
      $region15: #{tpu_custom_call.1} parent=5 // pred_region
        // Predicated region
        $region17: #{tpu_custom_call.1} parent=15 // pred_check
          %p153 = pneg %p46
        $region18: #{tpu_custom_call.1} parent=15 // pred_check_branch
          %155 = sbr.rel (%p153) target = $region20
        $region19: #{tpu_custom_call.1} parent=15 // pred_region
          %p156 = scmp.lt.s32.totalorder %s19, 1
          %s157 = scalar_select %p156, %s19, 1
          %p158 = scmp.lt.s32.totalorder %s20, 2
          %s159 = scalar_select %p158, %s20, 2
          %s160 = smul.addr %s159, 4
          %s161 = smul.addr %s157, 12
          %s162 = sadd.s32 %s160, %s161
          %s163 = smul.addr %s162, 8
          %s164 = scalar_lea.vmem %s0, %s163
        $region20: #{tpu_custom_call.1} parent=15 // pred_fallthru
          _
        // Predicated region
        $region21: #{tpu_custom_call.1} parent=15 // pred_check
          %p165 = pneg %p74
        $region22: #{tpu_custom_call.1} parent=15 // pred_check_branch
          %167 = sbr.rel (%p165) target = $region24
        $region23: #{tpu_custom_call.1} parent=15 // pred_region
          %p168 = scmp.lt.s32.totalorder %s19, 1
          %s169 = scalar_select %p168, %s19, 1
          %p170 = scmp.lt.s32.totalorder %s20, 2
          %s171 = scalar_select %p170, %s20, 2
          %s172 = smul.addr %s171, 4
          %s173 = smul.addr %s169, 12
          %s174 = sadd.s32 %s172, %s173
          %s175 = smul.addr %s174, 8
          %s176 = scalar_lea.vmem %s1, %s175
        $region24: #{tpu_custom_call.1} parent=15 // pred_fallthru
          _
        // Predicated region
        $region25: #{tpu_custom_call.1} parent=15 // pred_check
          %p177 = pneg %p100
        $region26: #{tpu_custom_call.1} parent=15 // pred_check_branch
          %179 = sbr.rel (%p177) target = $region28
        $region27: #{tpu_custom_call.1} parent=15 // pred_region
          %p180 = scmp.lt.s32.totalorder %s20, 2
          %s181 = scalar_select %p180, %s20, 2
          %s182 = smul.addr %s181, 2
          %s183 = scalar_lea.vmem %s2, %s182
        $region28: #{tpu_custom_call.1} parent=15 // pred_fallthru
          _
      $region16: #{tpu_custom_call.1} parent=5 // pred_fallthru
        _
      %p184 = scmp.le.s32.totalorder 1, %s12
      %p185 = scmp.lt.s32.totalorder %s12, 7
      %p186 = pnand %p184, %p185
      %p187 = pneg %p186
      // Predicated region
      $region29: #{tpu_custom_call.1} parent=5 // pred_check
        _
      $region30: #{tpu_custom_call.1} parent=5 // pred_check_branch
        %189 = sbr.rel (%p186) target = $region32
      $region31: #{tpu_custom_call.1} parent=5 // pred_region
        %s190 = ssub.s32 %s12, 1
        %p191 = scmp.lt.s32.totalorder %s21, 1
        %s192 = scalar_select %p191, %s21, 1
        %p193 = scmp.lt.s32.totalorder %s22, 2
        %s194 = scalar_select %p193, %s22, 2
        %s195 = smul.addr %s194, 4
        %s196 = smul.addr %s192, 12
        %s197 = sadd.s32 %s195, %s196
        %s198 = smul.addr %s197, 8
        %s199 = scalar_lea.vmem %s0, %s198
        %p200 = pneg %p52
        %p201 = pneg %p49
        %p202 = scmp.lt.s32.totalorder %s21, 1
        %s203 = scalar_select %p202, %s21, 1
        %p204 = scmp.lt.s32.totalorder %s22, 2
        %s205 = scalar_select %p204, %s22, 2
        %s206 = smul.addr %s205, 4
        %s207 = smul.addr %s203, 12
        %s208 = sadd.s32 %s206, %s207
        %s209 = smul.addr %s208, 8
        %s210 = scalar_lea.vmem %s1, %s209
        %p211 = pneg %p80
        %p212 = pneg %p77
        %p213 = scmp.lt.s32.totalorder %s22, 2
        %s214 = scalar_select %p213, %s22, 2
        %s215 = smul.addr %s214, 2
        %s216 = scalar_lea.vmem %s2, %s215
        %p217 = pneg %p106
        %p218 = pneg %p103
        %p219 = pneg %p134
        %p220 = pneg %p131
        %s221 = sand.u32 %s121, 1
        %s222 = scalar_lea.sflag [#allocation3], %s221
        %s223 = sand.u32 %s121, 1
        %s224 = smul.addr %s223, 8
        %s225 = scalar_lea.vmem [#allocation2], %s224
        %p226 = scmp.lt.s32.totalorder %s21, 1
        %s227 = scalar_select %p226, %s21, 1
        %p228 = scmp.lt.s32.totalorder %s22, 2
        %s229 = scalar_select %p228, %s22, 2
        %s230 = smul.addr %s229, 4
        %s231 = smul.addr %s227, 12
        %s232 = sadd.s32 %s230, %s231
        %s233 = smul.addr %s232, 8
        %s234 = scalar_lea.vmem %s0, %s233
        %p235 = scmp.lt.s32.totalorder %s21, 1
        %s236 = scalar_select %p235, %s21, 1
        %p237 = scmp.lt.s32.totalorder %s22, 2
        %s238 = scalar_select %p237, %s22, 2
        %s239 = smul.addr %s238, 4
        %s240 = smul.addr %s236, 12
        %s241 = sadd.s32 %s239, %s240
        %s242 = smul.addr %s241, 8
        %s243 = scalar_lea.vmem %s1, %s242
        %p244 = scmp.lt.s32.totalorder %s22, 2
        %s245 = scalar_select %p244, %s22, 2
        %s246 = smul.addr %s245, 2
        %s247 = scalar_lea.vmem %s2, %s246
        %v248 = vld [vmem:[%s234] sm:$0xff]
        %v249 = vld [vmem:[%s234 + $0x8] sm:$0xff]
        %v250 = vld [vmem:[%s234 + $0x10] sm:$0x1]
        %v251 = vld [vmem:[%s234 + $0x18] sm:$0x1]
        %v252 = vld [vmem:[%s243] sm:$0xff]
        %v253 = vld [vmem:[%s243 + $0x8] sm:$0xff]
        %v254 = vld [vmem:[%s243 + $0x10] sm:$0x1]
        %v255 = vld [vmem:[%s243 + $0x18] sm:$0x1]
        %v256 = vsub.f32 0.0, %v248
        %v257 = vsub.f32 0.0, %v249
        %v258 = vmax.f32 %v256, 0.0
        %v259 = vmax.f32 %v257, 0.0
        %v260 = vand.u32 2147483647, %v248
        %v261 = vand.u32 2147483647, %v249
        %v262 = vsub.f32 0.0, %v260
        %v263 = vsub.f32 0.0, %v261
        %v264 = vmul.f32 %v262, 1.442695
        %v265 = vpow.pop %v264
        %v266 = vmul.f32 %v263, 1.442695
        %v267 = vpow.pop %v266
        %v268 = vadd.f32 %v265, 1.0
        %v269 = vlog2.pop %v268
        %v270 = vmul.f32 %v269, 0.6931472
        %v271 = vmul.f32 -0.5, %v265
        %v272 = vadd.f32 %v271, 1.0
        %v273 = vmul.f32 %v272, %v265
        %v274 = vand.u32 2147483647, %v265
        %vm275 = vcmp.lt.f32.partialorder %v274, 0.0004427343
        %v276 = vsel %vm275, %v273, %v270
        %v277 = vadd.f32 %v267, 1.0
        %v278 = vlog2.pop %v277
        %v279 = vmul.f32 %v278, 0.6931472
        %v280 = vmul.f32 -0.5, %v267
        %v281 = vadd.f32 %v280, 1.0
        %v282 = vmul.f32 %v281, %v267
        %v283 = vand.u32 2147483647, %v267
        %vm284 = vcmp.lt.f32.partialorder %v283, 0.0004427343
        %v285 = vsel %vm284, %v282, %v279
        %v286 = vadd.f32 %v258, %v276
        %v287 = vadd.f32 %v259, %v285
        %v288 = vsub.f32 1.0, %v252
        %v289 = vsub.f32 1.0, %v253
        %v290 = vmul.f32 %v288, %v248
        %v291 = vmul.f32 %v289, %v249
        %v292 = vadd.f32 %v286, %v290
        %v293 = vadd.f32 %v287, %v291
        %v294 = vmul.f32 %v252, %v292
        %v295 = vmul.f32 %v253, %v293
        %vm296 = vcmask 1040384
        %v297 = vsel %vm296, %v294, 0.0
        %v298 = vsel %vm296, %v295, 0.0
        %v299 = vadd.f32 %v297, %v298
        %300 = vadd.xlane.f32.xlu0 %v299
        %v301 = vpop.xlane.xlu0 %300
        %v302 = vrot.slane %v301, 4
        %v303 = vadd.f32 %v301, %v302
        %v304 = vrot.slane %v303, 2
        %v305 = vadd.f32 %v303, %v304
        %v306 = vrot.slane %v305, 1
        %v307 = vadd.f32 %v305, %v306
        %s308 = vtos %v307
        %v309 = vmul.f32 %v288, %v292
        %v310 = vmul.f32 %v289, %v293
        %v311 = vsel %vm296, %v309, 0.0
        %v312 = vsel %vm296, %v310, 0.0
        %v313 = vadd.f32 %v311, %v312
        %314 = vadd.xlane.f32.xlu0 %v313
        %v315 = vpop.xlane.xlu0 %314
        %v316 = vrot.slane %v315, 4
        %v317 = vadd.f32 %v315, %v316
        %v318 = vrot.slane %v317, 2
        %v319 = vadd.f32 %v317, %v318
        %v320 = vrot.slane %v319, 1
        %v321 = vadd.f32 %v319, %v320
        %s322 = vtos %v321
        %v323 = vmax.f32 %v252, 1e-07
        %v324 = vmax.f32 %v253, 1e-07
        %v325 = vmin.f32 %v323, 0.9999999
        %v326 = vmin.f32 %v324, 0.9999999
        %v327 = vlog2.pop %v325
        %v328 = vmul.f32 %v327, 0.6931472
        %v329 = vlog2.pop %v326
        %v330 = vmul.f32 %v329, 0.6931472
        %v331 = vsub.f32 0.0, %v325
        %v332 = vsub.f32 0.0, %v326
        %v333 = vadd.f32 %v331, 1.0
        %v334 = vlog2.pop %v333
        %v335 = vmul.f32 %v334, 0.6931472
        %v336 = vmul.f32 -0.5, %v331
        %v337 = vadd.f32 %v336, 1.0
        %v338 = vmul.f32 %v337, %v331
        %v339 = vand.u32 2147483647, %v331
        %vm340 = vcmp.lt.f32.partialorder %v339, 0.0004427343
        %v341 = vsel %vm340, %v338, %v335
        %v342 = vadd.f32 %v332, 1.0
        %v343 = vlog2.pop %v342
        %v344 = vmul.f32 %v343, 0.6931472
        %v345 = vmul.f32 -0.5, %v332
        %v346 = vadd.f32 %v345, 1.0
        %v347 = vmul.f32 %v346, %v332
        %v348 = vand.u32 2147483647, %v332
        %vm349 = vcmp.lt.f32.partialorder %v348, 0.0004427343
        %v350 = vsel %vm349, %v347, %v344
        %v351 = vsub.f32 %v328, %v341
        %v352 = vsub.f32 %v330, %v350
        %v353 = vsub.f32 %v248, %v351
        %v354 = vsub.f32 %v249, %v352
        %v355 = vmul.f32 %v353, %v353
        %v356 = vmul.f32 %v354, %v354
        %v357 = vlaneseq
        %v358 = vshrl.u32 %v357, 7
        %v359 = vsub.s32 0, %v358
        %v360 = vrot.slane %v252, %v359
        %v361 = vlaneseq
        %v362 = vshrl.u32 %v361, 7
        %v363 = vsub.s32 0, %v362
        %v364 = vrot.slane %v253, %v363
        %v365 = vmul.f32 %v360, %v355
        %v366 = vmul.f32 %v364, %v356
        %v369 = vrot.slane %v365, 1
        %v370 = vrot.slane %v366, 1
        %vm373 = vcmask 1041408
        %v374 = vsel %vm373, %v369, 0.0
        %v375 = vsel %vm373, %v370, 0.0
        %v376 = vadd.f32 %v374, %v375
        %377 = vadd.xlane.f32.xlu0 %v376
        %v378 = vpop.xlane.xlu0 %377
        %v379 = vrot.slane %v378, 4
        %v380 = vadd.f32 %v378, %v379
        %v381 = vrot.slane %v380, 2
        %v382 = vadd.f32 %v380, %v381
        %v383 = vrot.slane %v382, 1
        %v384 = vadd.f32 %v382, %v383
        %s385 = vtos %v384
        %v386 = vld [vmem:[%s247] sm:$0x3]
        %388 = vset.pattern.permute.xlu0 0
        %389 = vperm.xlu0 %388, %v386
        %v390 = vpop.permute.xlu0 %389
        %v391 = vrot.slane %v390, 5
        %v393 = vmul.f32 %v252, %v391
        %v394 = vmul.f32 %v253, %v391
        %v395 = vadd.f32 %v393, 1e-07
        %v396 = vadd.f32 %v394, 1e-07
        %v397 = vsub.f32 %v248, %v395
        %v398 = vsub.f32 %v249, %v396
        %v399 = vmul.f32 %v397, %v397
        %v400 = vmul.f32 %v398, %v398
        %v401 = vmul.f32 %v360, %v399
        %v402 = vmul.f32 %v364, %v400
        %v405 = vrot.slane %v401, 3
        %v406 = vrot.slane %v402, 3
        %v409 = vsel %vm373, %v405, 0.0
        %v410 = vsel %vm373, %v406, 0.0
        %v411 = vadd.f32 %v409, %v410
        %412 = vadd.xlane.f32.xlu0 %v411
        %v413 = vpop.xlane.xlu0 %412
        %v414 = vrot.slane %v413, 4
        %v415 = vadd.f32 %v413, %v414
        %v416 = vrot.slane %v415, 2
        %v417 = vadd.f32 %v415, %v416
        %v418 = vrot.slane %v417, 1
        %v419 = vadd.f32 %v417, %v418
        %s420 = vtos %v419
        %v421 = vsub.f32 0.0, %v250
        %v422 = vsub.f32 0.0, %v251
        %v423 = vmax.f32 %v421, 0.0
        %v424 = vmax.f32 %v422, 0.0
        %v425 = vand.u32 2147483647, %v250
        %v426 = vand.u32 2147483647, %v251
        %v427 = vsub.f32 0.0, %v425
        %v428 = vsub.f32 0.0, %v426
        %v429 = vmul.f32 %v427, 1.442695
        %v430 = vpow.pop %v429
        %v431 = vmul.f32 %v428, 1.442695
        %v432 = vpow.pop %v431
        %v433 = vadd.f32 %v430, 1.0
        %v434 = vlog2.pop %v433
        %v435 = vmul.f32 %v434, 0.6931472
        %v436 = vmul.f32 -0.5, %v430
        %v437 = vadd.f32 %v436, 1.0
        %v438 = vmul.f32 %v437, %v430
        %v439 = vand.u32 2147483647, %v430
        %vm440 = vcmp.lt.f32.partialorder %v439, 0.0004427343
        %v441 = vsel %vm440, %v438, %v435
        %v442 = vadd.f32 %v432, 1.0
        %v443 = vlog2.pop %v442
        %v444 = vmul.f32 %v443, 0.6931472
        %v445 = vmul.f32 -0.5, %v432
        %v446 = vadd.f32 %v445, 1.0
        %v447 = vmul.f32 %v446, %v432
        %v448 = vand.u32 2147483647, %v432
        %vm449 = vcmp.lt.f32.partialorder %v448, 0.0004427343
        %v450 = vsel %vm449, %v447, %v444
        %v451 = vadd.f32 %v423, %v441
        %v452 = vadd.f32 %v424, %v450
        %v453 = vsub.f32 1.0, %v254
        %v454 = vsub.f32 1.0, %v255
        %v455 = vmul.f32 %v453, %v250
        %v456 = vmul.f32 %v454, %v251
        %v457 = vadd.f32 %v451, %v455
        %v458 = vadd.f32 %v452, %v456
        %v459 = vmul.f32 %v360, %v292
        %v460 = vmul.f32 %v364, %v293
        %v461 = vmul.f32 %v360, %v457
        %v462 = vmul.f32 %v364, %v458
        %vm467 = vcmask 1042432
        %v468 = vrot.slane %v459, 5
        %v469 = vrot.slane %v461, 5
        %v470 = vsel %vm467, %v468, %v469
        %v471 = vrot.slane %v460, 5
        %v472 = vrot.slane %v462, 5
        %v473 = vsel %vm467, %v471, %v472
        %vm476 = vcmask 1043456
        %v477 = vsel %vm476, %v470, 0.0
        %v478 = vsel %vm476, %v473, 0.0
        %v479 = vadd.f32 %v477, %v478
        %480 = vadd.xlane.f32.xlu0 %v479
        %v481 = vpop.xlane.xlu0 %480
        %v482 = vrot.slane %v481, 4
        %v483 = vadd.f32 %v481, %v482
        %v484 = vrot.slane %v483, 2
        %v485 = vadd.f32 %v483, %v484
        %v486 = vrot.slane %v485, 1
        %v487 = vadd.f32 %v485, %v486
        %s488 = vtos %v487
        %489 = vst [vmem:[%s225] sm:$0xff] 0.0
        %v490 = vstv %s308
        %491 = vst [vmem:[%s225] sm:$0x1] %v490
        %v492 = vstv %s322
        %493 = vst [vmem:[%s225 + $0x1] sm:$0x1] %v492
        %v494 = vstv %s385
        %495 = vst [vmem:[%s225 + $0x2] sm:$0x1] %v494
        %v496 = vstv %s420
        %497 = vst [vmem:[%s225 + $0x3] sm:$0x1] %v496
        %v498 = vstv %s488
        %499 = vst [vmem:[%s225 + $0x4] sm:$0x1] %v498
        %s500 = sand.u32 %s121, 1
        %s501 = scalar_lea.sflag [#allocation3], %s500
        %s502 = sand.u32 %s121, 1
        %s503 = smul.addr %s502, 8
        %s504 = scalar_lea.vmem [#allocation2], %s503
        // Predicated region
        $region33: #{tpu_custom_call.1} parent=31 // pred_check
          %p505 = pneg %p131
        $region34: #{tpu_custom_call.1} parent=31 // pred_check_branch
          %507 = sbr.rel (%p505) target = $region36
        $region35: #{tpu_custom_call.1} parent=31 // pred_region
          %s509 = ssub.s32 128, 128
          %510 = vsyncadd %s501, %s509
          %s511 = smul.addr %s21, 3
          %s512 = sadd.s32 %s22, %s511
          %s513 = smul.addr %s512, 128
          %s514 = scalar_lea.hbm %s3, %s513
          %s516 = sshll.u32 %s504, 4
          %s517 = int_to_ptr.vmem [resolvable:$true] %s516
          %519 = dma.vmem_to_hbm [thread:$0]  %s517, 128, %s514, %s501
        $region36: #{tpu_custom_call.1} parent=31 // pred_fallthru
          _
      $region32: #{tpu_custom_call.1} parent=5 // pred_fallthru
        _
      %p520 = scmp.le.s32.totalorder 2, %s12
      // Predicated region
      $region37: #{tpu_custom_call.1} parent=5 // pred_check
        %p521 = pneg %p520
      $region38: #{tpu_custom_call.1} parent=5 // pred_check_branch
        %523 = sbr.rel (%p521) target = $region40
      $region39: #{tpu_custom_call.1} parent=5 // pred_region
        %s524 = ssub.s32 %s12, 2
        // Predicated region
        $region41: #{tpu_custom_call.1} parent=39 // pred_check
          %p525 = pneg %p137
        $region42: #{tpu_custom_call.1} parent=39 // pred_check_branch
          %527 = sbr.rel (%p525) target = $region44
        $region43: #{tpu_custom_call.1} parent=39 // pred_region
          %s528 = sand.u32 %s122, 1
          %s529 = scalar_lea.sflag [#allocation3], %s528
          %s530 = sand.u32 %s122, 1
          %s531 = smul.addr %s530, 8
          %s532 = scalar_lea.vmem [#allocation2], %s531
          %533 = dma.done %s529, 128
        $region44: #{tpu_custom_call.1} parent=39 // pred_fallthru
          _
      $region40: #{tpu_custom_call.1} parent=5 // pred_fallthru
        _
    $region6: #{tpu_custom_call.1} parent=1 // loop_footer
      %s16 = sadd.s32 1, %s12
    $region7: #{tpu_custom_call.1} parent=1 // loop_footer_branch
      %11 = sbr.rel target = $region3
    $region8: #{tpu_custom_call.1} parent=1 // loop_exit
      _
    %534 = vsyncpa [#allocation3], 1
    %s535 = scalar_lea.sflag [#allocation3], 1
    %536 = vsyncpa %s535, 1

</llo_original>
